<compile_context>
chip_gen: v5e
topology: v5e:2x2
jax: 0.10.0
libtpu: 0.0.40
codegen_flags: <defaults>
</compile_context>

<pallas_src>
import functools

import jax
import jax.numpy as jnp
from jax.experimental import pallas as pl
from jax.experimental.pallas import tpu as pltpu


def _mini_attend_kernel(*refs, has_kv, flat):
    if has_kv:
        x_ref, kv_ref, w1_ref, b1_ref, w2_ref, b2_ref, o_ref = refs
    else:
        x_ref, w1_ref, b1_ref, w2_ref, b2_ref, o_ref = refs
        kv_ref = None

    tb, s, h = x_ref.shape

    # Flatten (TB, S, h) -> (TB*S, h): one long lane-dense MXU M-stream per
    # layer. With S % 8 == 0 this reshape is a layout no-op.
    x = x_ref[...].reshape(tb * s, h)
    if kv_ref is not None:
        x = x * kv_ref[...].reshape(tb * s, h)          # VPU elementwise, f32

    # fc1: bf16 MXU operands, f32 accumulation; bias + relu in f32.
    z = jnp.dot(x.astype(jnp.bfloat16), w1_ref[...],
                preferred_element_type=jnp.float32)
    z = jnp.maximum(z + b1_ref[...], 0.0)

    # fc2 matmul (bf16 operands, f32 acc); its bias is constant over S so it
    # commutes with the max and is added after the reduction.
    z = jnp.dot(z.astype(jnp.bfloat16), w2_ref[...],
                preferred_element_type=jnp.float32)     # (TB*S, h) f32

    if flat:
        out = jnp.max(z.reshape(tb, s, h), axis=1) + b2_ref[...]   # (TB, h)
        o_ref[...] = out.astype(o_ref.dtype)
    else:
        out = (z + b2_ref[...]).reshape(tb, s, h)                   # (TB, S, h)
        o_ref[...] = out.astype(o_ref.dtype)


def _pick_tb(B, S, target_rows=1024):
    """Pick the batch tile tb (a divisor of B) such that:
       * tb % 8 == 0 or tb == B  -> the flat (tb, h) output block is
         sublane-aligned (no masked partial stores / lowering failures);
       * tb * S <= target_rows   -> bounded per-step VMEM slabs, long MXU M.
    Preference: >= 4 grid steps (2 per v7x TensorCore), then >= 2, then 1;
    within each tier pick the largest tb (longest M-stream per step)."""
    aligned = [tb for tb in range(1, B + 1)
               if B % tb == 0 and (tb % 8 == 0 or tb == B)]
    candidates = [tb for tb in aligned if tb * S <= target_rows]
    if not candidates:          # S alone exceeds target_rows: take smallest tile
        candidates = aligned
    for min_steps in (4, 2, 1):
        ok = [tb for tb in candidates if B // tb >= min_steps]
        if ok:
            return max(ok)
    return B


def mini_attend(x, w1, b1, w2, b2, kv=None, flat=True):
    """x, kv: (B, S, h) f32; w1, w2: (h, h) in (in, out) layout; b1, b2: (h,)."""
    B, S, h = x.shape
    assert w1.shape == (h, h) and w2.shape == (h, h)

    # Weights go to the MXU as bf16 (cast once here -> half the weight DMA);
    # biases stay f32 and are applied on the f32 accumulator.
    w1b = w1.astype(jnp.bfloat16)
    w2b = w2.astype(jnp.bfloat16)
    b1 = b1.reshape(1, h).astype(jnp.float32)
    b2 = b2.reshape(1, h).astype(jnp.float32)

    tb = _pick_tb(B, S)
    grid = (B // tb,)

    x_spec = pl.BlockSpec((tb, S, h), lambda i: (i, 0, 0))
    w_spec = pl.BlockSpec((h, h), lambda i: (0, 0))      # resident across steps
    b_spec = pl.BlockSpec((1, h), lambda i: (0, 0))

    in_specs = [x_spec]
    args = [x]
    if kv is not None:
        in_specs.append(x_spec)
        args.append(kv)
    in_specs += [w_spec, b_spec, w_spec, b_spec]
    args += [w1b, b1, w2b, b2]

    if flat:
        out_shape = jax.ShapeDtypeStruct((B, h), x.dtype)
        out_spec = pl.BlockSpec((tb, h), lambda i: (i, 0))
    else:
        out_shape = jax.ShapeDtypeStruct((B, S, h), x.dtype)
        out_spec = pl.BlockSpec((tb, S, h), lambda i: (i, 0, 0))

    # Advisory cost so XLA overlaps this us-scale call with surrounding HLO.
    def _nbytes(a):
        return a.size * a.dtype.itemsize
    bytes_accessed = sum(_nbytes(a) for a in args) + (
        out_shape.size * jnp.dtype(out_shape.dtype).itemsize)
    cost = pl.CostEstimate(flops=4 * B * S * h * h,
                           transcendentals=0,
                           bytes_accessed=int(bytes_accessed))

    kernel = functools.partial(_mini_attend_kernel,
                               has_kv=kv is not None, flat=flat)

    return pl.pallas_call(
        kernel,
        out_shape=out_shape,
        grid_spec=pltpu.PrefetchScalarGridSpec(
            num_scalar_prefetch=0,
            grid=grid,
            in_specs=in_specs,
            out_specs=out_spec,
        ),
        compiler_params=pltpu.CompilerParams(
            dimension_semantics=("parallel",)),
        cost_estimate=cost,
    )(*args)


def mini_attend_ref(x, w1, b1, w2, b2, kv=None, flat=True):
    # Pure-JAX f32 reference of the PyTorch forward.
    if kv is not None:
        x = x * kv
    z = jnp.maximum(jnp.dot(x, w1) + b1, 0.0)
    z = jnp.dot(z, w2) + b2
    if flat:
        z = jnp.max(z, axis=-2)
    return z


if __name__ == "__main__":
    # Small shapes consistent with the module: hidden h lane-dense at 128,
    # S sublane-aligned (16), B chosen so _pick_tb yields tb=8 and grid=(4,)
    # (>= 2 steps per TensorCore on v7x, 8*16 = 128 MXU rows per step).
    B, S, h = 32, 16, 128

    key = jax.random.PRNGKey(0)
    kx, kkv, kw1, kb1, kw2, kb2 = jax.random.split(key, 6)

    x = jax.random.normal(kx, (B, S, h), dtype=jnp.float32)
    kv = jax.random.normal(kkv, (B, S, h), dtype=jnp.float32)

    # nn.Linear weight is (out, in); generate in that shape then transpose to
    # the (in, out) layout the kernel consumes.
    w1_pt = jax.random.normal(kw1, (h, h), dtype=jnp.float32) * 0.05
    w2_pt = jax.random.normal(kw2, (h, h), dtype=jnp.float32) * 0.05
    b1 = jax.random.normal(kb1, (h,), dtype=jnp.float32) * 0.1
    b2 = jax.random.normal(kb2, (h,), dtype=jnp.float32) * 0.1
    w1 = w1_pt.T
    w2 = w2_pt.T

    # bf16 MXU operands vs the f32 reference -> a few-percent-of-magnitude tol.
    TOL = dict(atol=2e-2, rtol=2e-2)

    # Main path: kv provided, flat=True (MiniAttend default reduce).
    out = jax.block_until_ready(mini_attend(x, w1, b1, w2, b2, kv=kv, flat=True))
    ref = mini_attend_ref(x, w1, b1, w2, b2, kv=kv, flat=True)
    assert out.shape == (B, h)
    assert jnp.allclose(out, ref, **TOL), float(jnp.max(jnp.abs(out - ref)))

    # kv=None path (default forward signature).
    out2 = jax.block_until_ready(mini_attend(x, w1, b1, w2, b2, kv=None, flat=True))
    ref2 = mini_attend_ref(x, w1, b1, w2, b2, kv=None, flat=True)
    assert jnp.allclose(out2, ref2, **TOL)

    # flat=False path (no sequence-max).
    out3 = jax.block_until_ready(mini_attend(x, w1, b1, w2, b2, kv=kv, flat=False))
    ref3 = mini_attend_ref(x, w1, b1, w2, b2, kv=kv, flat=False)
    assert out3.shape == (B, S, h)
    assert jnp.allclose(out3, ref3, **TOL)

    print("KERNEL_OK")
</pallas_src>

<mosaic_0001>
module attributes {stable_mosaic.version = 11 : i64} {
  func.func @_mini_attend_kernel(%arg0: i32, %arg1: memref<8x16x128xf32, #tpu.memory_space<vmem>>, %arg2: memref<8x16x128xf32, #tpu.memory_space<vmem>>, %arg3: memref<128x128xbf16, #tpu.memory_space<vmem>>, %arg4: memref<1x128xf32, #tpu.memory_space<vmem>>, %arg5: memref<128x128xbf16, #tpu.memory_space<vmem>>, %arg6: memref<1x128xf32, #tpu.memory_space<vmem>>, %arg7: memref<8x128xf32, #tpu.memory_space<vmem>>) attributes {dimension_semantics = [#tpu.dimension_semantics<parallel>], iteration_bounds = array<i64: 4>, scalar_prefetch = 0 : i64, scratch_operands = 0 : i64, tpu.core_type = #tpu.core_type<tc>, window_params = [{transform_indices = @transform_0, window_bounds = array<i64: 8, 16, 128>}, {transform_indices = @transform_1, window_bounds = array<i64: 8, 16, 128>}, {pipeline_mode = #tpu.pipeline_mode<synchronous>, transform_indices = @transform_2, window_bounds = array<i64: 128, 128>}, {pipeline_mode = #tpu.pipeline_mode<synchronous>, transform_indices = @transform_3, window_bounds = array<i64: 1, 128>}, {pipeline_mode = #tpu.pipeline_mode<synchronous>, transform_indices = @transform_4, window_bounds = array<i64: 128, 128>}, {pipeline_mode = #tpu.pipeline_mode<synchronous>, transform_indices = @transform_5, window_bounds = array<i64: 1, 128>}, {transform_indices = @transform_6, window_bounds = array<i64: 8, 128>}]} {
    %c0 = arith.constant 0 : index
    %c0_0 = arith.constant 0 : index
    %c0_1 = arith.constant 0 : index
    %0 = vector.load %arg1[%c0, %c0_0, %c0_1] : memref<8x16x128xf32, #tpu.memory_space<vmem>>, vector<8x16x128xf32>
    %1 = vector.shape_cast %0 : vector<8x16x128xf32> to vector<128x128xf32>
    %c0_2 = arith.constant 0 : index
    %c0_3 = arith.constant 0 : index
    %c0_4 = arith.constant 0 : index
    %2 = vector.load %arg2[%c0_2, %c0_3, %c0_4] : memref<8x16x128xf32, #tpu.memory_space<vmem>>, vector<8x16x128xf32>
    %3 = vector.shape_cast %2 : vector<8x16x128xf32> to vector<128x128xf32>
    %4 = arith.mulf %1, %3 : vector<128x128xf32>
    %5 = arith.truncf %4 : vector<128x128xf32> to vector<128x128xbf16>
    %c0_5 = arith.constant 0 : index
    %c0_6 = arith.constant 0 : index
    %6 = vector.load %arg3[%c0_5, %c0_6] : memref<128x128xbf16, #tpu.memory_space<vmem>>, vector<128x128xbf16>
    %cst = arith.constant dense<0.000000e+00> : vector<128x128xf32>
    %7 = tpu.matmul %5, %6, %cst {dimension_numbers = #tpu.dot_dimension_numbers<[1], [0], [0], [1], [0, 0, 1, 1], [], []>} : vector<128x128xbf16>, vector<128x128xbf16>, vector<128x128xf32> -> vector<128x128xf32>
    %c0_7 = arith.constant 0 : index
    %c0_8 = arith.constant 0 : index
    %8 = vector.load %arg4[%c0_7, %c0_8] : memref<1x128xf32, #tpu.memory_space<vmem>>, vector<1x128xf32>
    %9 = vector.broadcast %8 : vector<1x128xf32> to vector<128x128xf32>
    %10 = arith.addf %7, %9 : vector<128x128xf32>
    %cst_9 = arith.constant 0.000000e+00 : f32
    %11 = vector.broadcast %cst_9 : f32 to vector<128x128xf32>
    %12 = arith.maximumf %10, %11 : vector<128x128xf32>
    %13 = arith.truncf %12 : vector<128x128xf32> to vector<128x128xbf16>
    %c0_10 = arith.constant 0 : index
    %c0_11 = arith.constant 0 : index
    %14 = vector.load %arg5[%c0_10, %c0_11] : memref<128x128xbf16, #tpu.memory_space<vmem>>, vector<128x128xbf16>
    %cst_12 = arith.constant dense<0.000000e+00> : vector<128x128xf32>
    %15 = tpu.matmul %13, %14, %cst_12 {dimension_numbers = #tpu.dot_dimension_numbers<[1], [0], [0], [1], [0, 0, 1, 1], [], []>} : vector<128x128xbf16>, vector<128x128xbf16>, vector<128x128xf32> -> vector<128x128xf32>
    %16 = vector.shape_cast %15 : vector<128x128xf32> to vector<8x16x128xf32>
    %cst_13 = arith.constant dense<0xFF800000> : vector<8x128xf32>
    %17 = vector.multi_reduction <maximumf>, %16, %cst_13 [1] : vector<8x16x128xf32> to vector<8x128xf32>
    %c0_14 = arith.constant 0 : index
    %c0_15 = arith.constant 0 : index
    %18 = vector.load %arg6[%c0_14, %c0_15] : memref<1x128xf32, #tpu.memory_space<vmem>>, vector<1x128xf32>
    %19 = vector.broadcast %18 : vector<1x128xf32> to vector<8x128xf32>
    %20 = arith.addf %17, %19 : vector<8x128xf32>
    %c0_16 = arith.constant 0 : index
    %c0_17 = arith.constant 0 : index
    %21 = vector.load %arg7[%c0_16, %c0_17] : memref<8x128xf32, #tpu.memory_space<vmem>>, vector<8x128xf32>
    tpu.vector_store %arg7[%c0_16, %c0_17], %20 {strides = array<i32>} : memref<8x128xf32, #tpu.memory_space<vmem>>, vector<8x128xf32>,
    return
  }
  func.func @transform_0(%arg0: i32) -> (i32, i32, i32) {
    %c0_i32 = arith.constant 0 : i32
    %c0_i32_0 = arith.constant 0 : i32
    %c0_i32_1 = arith.constant 0 : i32
    return %arg0, %c0_i32, %c0_i32_0 : i32, i32, i32
  }
  func.func @transform_1(%arg0: i32) -> (i32, i32, i32) {
    %c0_i32 = arith.constant 0 : i32
    %c0_i32_0 = arith.constant 0 : i32
    %c0_i32_1 = arith.constant 0 : i32
    return %arg0, %c0_i32, %c0_i32_0 : i32, i32, i32
  }
  func.func @transform_2(%arg0: i32) -> (i32, i32) {
    %c0_i32 = arith.constant 0 : i32
    %c0_i32_0 = arith.constant 0 : i32
    %c0_i32_1 = arith.constant 0 : i32
    return %c0_i32, %c0_i32_0 : i32, i32
  }
  func.func @transform_3(%arg0: i32) -> (i32, i32) {
    %c0_i32 = arith.constant 0 : i32
    %c0_i32_0 = arith.constant 0 : i32
    %c0_i32_1 = arith.constant 0 : i32
    return %c0_i32, %c0_i32_0 : i32, i32
  }
  func.func @transform_4(%arg0: i32) -> (i32, i32) {
    %c0_i32 = arith.constant 0 : i32
    %c0_i32_0 = arith.constant 0 : i32
    %c0_i32_1 = arith.constant 0 : i32
    return %c0_i32, %c0_i32_0 : i32, i32
  }
  func.func @transform_5(%arg0: i32) -> (i32, i32) {
    %c0_i32 = arith.constant 0 : i32
    %c0_i32_0 = arith.constant 0 : i32
    %c0_i32_1 = arith.constant 0 : i32
    return %c0_i32, %c0_i32_0 : i32, i32
  }
  func.func @transform_6(%arg0: i32) -> (i32, i32) {
    %c0_i32 = arith.constant 0 : i32
    %c0_i32_0 = arith.constant 0 : i32
    return %arg0, %c0_i32 : i32, i32
  }
}

</mosaic_0001>

<llo_original>
// kernel: tpu_custom_call.1
$region0: #{tpu_custom_call.1}
  #allocation0 [shape = 'u32[]', space=smem, size = 0x4, offset = 0x4, fixed_abs, tag = 'smem constant byte address 0x4 - core index']
  #allocation1 [shape = 'u32[72,128]{1,0:T(1,128)}', space=vmem, size = 0x9000, scoped, tag = 'internal scratch']
  %s0 = inlined_call_operand.hbm [shape: f32[32,16,128], index: 0, kind: input, shape index: {}]
  %s1 = inlined_call_operand.hbm [shape: f32[32,16,128], index: 1, kind: input, shape index: {}]
  %s2 = inlined_call_operand.hbm [shape: bf16[128,128], index: 2, kind: input, shape index: {}]
  %s3 = inlined_call_operand.vmem [shape: f32[1,128], index: 3, kind: input, shape index: {}]
  %s4 = inlined_call_operand.hbm [shape: bf16[128,128], index: 4, kind: input, shape index: {}]
  %s5 = inlined_call_operand.vmem [shape: f32[1,128], index: 5, kind: input, shape index: {}]
  %s6 = inlined_call_operand.hbm [shape: f32[32,128], index: 6, kind: output, shape index: {}]
  %s7 = sld [smem:[#allocation0]]
  $region73: #{tpu_custom_call.1} parent=0
    _
  %s9 = ssub.s32 1, %s7
  %s10 = scalar_select 0, %s9, %s7
  $region1: #{tpu_custom_call.1} parent=0
    #allocation2 [shape = 'u8[131072]{0}', space=vmem, size = 0x20000, scoped, tag = 'input window, operand 0']
    #allocation3 [shape = 's32[2]{0}', space=sflag, size = 0x8, scoped, tag = 'scoped memory for tpu_custom_call.1']
    #allocation4 [shape = 's32[2]{0}', space=sflag, size = 0x8, scoped, tag = 'scoped memory for tpu_custom_call.1']
    #allocation5 [shape = 'u8[131072]{0}', space=vmem, size = 0x20000, scoped, tag = 'input window, operand 1']
    #allocation6 [shape = 's32[2]{0}', space=sflag, size = 0x8, scoped, tag = 'scoped memory for tpu_custom_call.1']
    #allocation7 [shape = 'u8[32768]{0}', space=vmem, size = 0x8000, scoped, tag = 'input window, operand 2, single buffered']
    #allocation8 [shape = 'u8[32768]{0}', space=vmem, size = 0x8000, scoped, tag = 'input window, operand 4, single buffered']
    #allocation9 [shape = 's32[1]{0}', space=sflag, size = 0x4, scoped, tag = 'scoped memory for tpu_custom_call.1']
    #allocation10 [shape = 'u8[8192]{0}', space=vmem, size = 0x2000, scoped, tag = 'output window, operand 0']
    %11 = vsyncpa [#allocation3], 0
    %s12 = scalar_lea.sflag [#allocation3], 1
    %13 = vsyncpa %s12, 0
    %14 = vsyncpa [#allocation6], 0
    %s15 = scalar_lea.sflag [#allocation6], 1
    %16 = vsyncpa %s15, 0
    %17 = vsyncpa [#allocation9], 0
    %18 = vsyncpa [#allocation4], 0
    %s19 = scalar_lea.sflag [#allocation4], 1
    %20 = vsyncpa %s19, 0
    loop: start=0, step=1, limit=6
    $region2: #{tpu_custom_call.1} parent=1 // loop_pre_header
      _
    $region3: #{tpu_custom_call.1} parent=1 // loop_header
      %s22 = sphi 0, %s26
      %p23 = scmp.ge.s32.totalorder %s22, 6
      %s32 = sphi 0, %s34
      %s35 = sphi 0, %s32
      %s36 = sphi 0, %s35
      %s52 = sphi 0, %s36
      %s58 = sphi 0, %s60
      %s61 = sphi 0, %s58
      %s62 = sphi 0, %s61
      %s78 = sphi 0, %s62
      %s82 = sphi 0, %s82
      %s84 = sphi 0, %s82
      %s85 = sphi 0, %s84
      %s99 = sphi 0, %s85
      %s103 = sphi 0, %s103
      %s105 = sphi 0, %s103
      %s106 = sphi 0, %s105
      %s120 = sphi 0, %s106
      %s124 = sphi 0, %s124
      %s126 = sphi 0, %s124
      %s127 = sphi 0, %s126
      %s141 = sphi 0, %s127
      %s145 = sphi 0, %s145
      %s147 = sphi 0, %s145
      %s148 = sphi 0, %s147
      %s162 = sphi 0, %s148
      %s168 = sphi 0, %s170
      %s171 = sphi 0, %s168
      %s172 = sphi 0, %s171
      %s188 = sphi 0, %s172
    $region4: #{tpu_custom_call.1} parent=1 // loop_header_branch
      %25 = sbr.rel (%p23) target = $region8
    $region5: #{tpu_custom_call.1} parent=1 // loop_body
      %s27 = ssub.s32 %s22, 1
      %s28 = ssub.s32 %s22, 2
      %s29 = sadd.s32 %s22, 1
      %s30 = ssub.s32 %s22, %s29
      %p31 = scmp.eq.s32.totalorder %s30, 0
      %s33 = sadd.s32 %s32, 1
      %s34 = scalar_select %p31, %s32, %s33
      %p37 = pneg %p31
      %p38 = scmp.eq.s32.totalorder %s22, 3
      %p39 = por %p37, %p38
      %p40 = scmp.ne.s32.totalorder %s32, %s35
      %p41 = scmp.eq.s32.totalorder %s22, 0
      %p42 = por %p40, %p41
      %p43 = scmp.ne.s32.totalorder %s32, %s35
      %p44 = scmp.eq.s32.totalorder %s27, 3
      %p45 = por %p43, %p44
      %p46 = scmp.ne.s32.totalorder %s35, %s36
      %p47 = scmp.eq.s32.totalorder %s27, 0
      %p48 = por %p46, %p47
      %p49 = scmp.ne.s32.totalorder %s35, %s36
      %p50 = scmp.eq.s32.totalorder %s28, 3
      %p51 = por %p49, %p50
      %p53 = scmp.ne.s32.totalorder %s36, %s52
      %p54 = scmp.eq.s32.totalorder %s28, 0
      %p55 = por %p53, %p54
      %s56 = ssub.s32 %s22, %s29
      %p57 = scmp.eq.s32.totalorder %s56, 0
      %s59 = sadd.s32 %s58, 1
      %s60 = scalar_select %p57, %s58, %s59
      %p63 = pneg %p57
      %p64 = scmp.eq.s32.totalorder %s22, 3
      %p65 = por %p63, %p64
      %p66 = scmp.ne.s32.totalorder %s58, %s61
      %p67 = scmp.eq.s32.totalorder %s22, 0
      %p68 = por %p66, %p67
      %p69 = scmp.ne.s32.totalorder %s58, %s61
      %p70 = scmp.eq.s32.totalorder %s27, 3
      %p71 = por %p69, %p70
      %p72 = scmp.ne.s32.totalorder %s61, %s62
      %p73 = scmp.eq.s32.totalorder %s27, 0
      %p74 = por %p72, %p73
      %p75 = scmp.ne.s32.totalorder %s61, %s62
      %p76 = scmp.eq.s32.totalorder %s28, 3
      %p77 = por %p75, %p76
      %p79 = scmp.ne.s32.totalorder %s62, %s78
      %p80 = scmp.eq.s32.totalorder %s28, 0
      %p81 = por %p79, %p80
      %s83 = sadd.s32 %s82, 1
      %p86 = scmp.eq.s32.totalorder %s22, 3
      %p87 = scmp.ne.s32.totalorder %s82, %s84
      %p88 = scmp.eq.s32.totalorder %s22, 0
      %p89 = por %p87, %p88
      %p90 = scmp.ne.s32.totalorder %s82, %s84
      %p91 = scmp.eq.s32.totalorder %s27, 3
      %p92 = por %p90, %p91
      %p93 = scmp.ne.s32.totalorder %s84, %s85
      %p94 = scmp.eq.s32.totalorder %s27, 0
      %p95 = por %p93, %p94
      %p96 = scmp.ne.s32.totalorder %s84, %s85
      %p97 = scmp.eq.s32.totalorder %s28, 3
      %p98 = por %p96, %p97
      %p100 = scmp.ne.s32.totalorder %s85, %s99
      %p101 = scmp.eq.s32.totalorder %s28, 0
      %p102 = por %p100, %p101
      %s104 = sadd.s32 %s103, 1
      %p107 = scmp.eq.s32.totalorder %s22, 3
      %p108 = scmp.ne.s32.totalorder %s103, %s105
      %p109 = scmp.eq.s32.totalorder %s22, 0
      %p110 = por %p108, %p109
      %p111 = scmp.ne.s32.totalorder %s103, %s105
      %p112 = scmp.eq.s32.totalorder %s27, 3
      %p113 = por %p111, %p112
      %p114 = scmp.ne.s32.totalorder %s105, %s106
      %p115 = scmp.eq.s32.totalorder %s27, 0
      %p116 = por %p114, %p115
      %p117 = scmp.ne.s32.totalorder %s105, %s106
      %p118 = scmp.eq.s32.totalorder %s28, 3
      %p119 = por %p117, %p118
      %p121 = scmp.ne.s32.totalorder %s106, %s120
      %p122 = scmp.eq.s32.totalorder %s28, 0
      %p123 = por %p121, %p122
      %s125 = sadd.s32 %s124, 1
      %p128 = scmp.eq.s32.totalorder %s22, 3
      %p129 = scmp.ne.s32.totalorder %s124, %s126
      %p130 = scmp.eq.s32.totalorder %s22, 0
      %p131 = por %p129, %p130
      %p132 = scmp.ne.s32.totalorder %s124, %s126
      %p133 = scmp.eq.s32.totalorder %s27, 3
      %p134 = por %p132, %p133
      %p135 = scmp.ne.s32.totalorder %s126, %s127
      %p136 = scmp.eq.s32.totalorder %s27, 0
      %p137 = por %p135, %p136
      %p138 = scmp.ne.s32.totalorder %s126, %s127
      %p139 = scmp.eq.s32.totalorder %s28, 3
      %p140 = por %p138, %p139
      %p142 = scmp.ne.s32.totalorder %s127, %s141
      %p143 = scmp.eq.s32.totalorder %s28, 0
      %p144 = por %p142, %p143
      %s146 = sadd.s32 %s145, 1
      %p149 = scmp.eq.s32.totalorder %s22, 3
      %p150 = scmp.ne.s32.totalorder %s145, %s147
      %p151 = scmp.eq.s32.totalorder %s22, 0
      %p152 = por %p150, %p151
      %p153 = scmp.ne.s32.totalorder %s145, %s147
      %p154 = scmp.eq.s32.totalorder %s27, 3
      %p155 = por %p153, %p154
      %p156 = scmp.ne.s32.totalorder %s147, %s148
      %p157 = scmp.eq.s32.totalorder %s27, 0
      %p158 = por %p156, %p157
      %p159 = scmp.ne.s32.totalorder %s147, %s148
      %p160 = scmp.eq.s32.totalorder %s28, 3
      %p161 = por %p159, %p160
      %p163 = scmp.ne.s32.totalorder %s148, %s162
      %p164 = scmp.eq.s32.totalorder %s28, 0
      %p165 = por %p163, %p164
      %s166 = ssub.s32 %s22, %s29
      %p167 = scmp.eq.s32.totalorder %s166, 0
      %s169 = sadd.s32 %s168, 1
      %s170 = scalar_select %p167, %s168, %s169
      %p173 = pneg %p167
      %p174 = scmp.eq.s32.totalorder %s22, 3
      %p175 = por %p173, %p174
      %p176 = scmp.ne.s32.totalorder %s168, %s171
      %p177 = scmp.eq.s32.totalorder %s22, 0
      %p178 = por %p176, %p177
      %p179 = scmp.ne.s32.totalorder %s168, %s171
      %p180 = scmp.eq.s32.totalorder %s27, 3
      %p181 = por %p179, %p180
      %p182 = scmp.ne.s32.totalorder %s171, %s172
      %p183 = scmp.eq.s32.totalorder %s27, 0
      %p184 = por %p182, %p183
      %p185 = scmp.ne.s32.totalorder %s171, %s172
      %p186 = scmp.eq.s32.totalorder %s28, 3
      %p187 = por %p185, %p186
      %p189 = scmp.ne.s32.totalorder %s172, %s188
      %p190 = scmp.eq.s32.totalorder %s28, 0
      %p191 = por %p189, %p190
      %p192 = scmp.le.s32.totalorder 1, %s22
      %p193 = scmp.lt.s32.totalorder %s22, 5
      %p194 = pnand %p192, %p193
      %p195 = pneg %p194
      // Predicated region
      $region9: #{tpu_custom_call.1} parent=5 // pred_check
        _
      $region10: #{tpu_custom_call.1} parent=5 // pred_check_branch
        %197 = sbr.rel (%p194) target = $region12
      $region11: #{tpu_custom_call.1} parent=5 // pred_region
        %s198 = ssub.s32 %s22, 1
        // Predicated region
        $region13: #{tpu_custom_call.1} parent=11 // pred_check
          %p199 = pneg %p95
        $region14: #{tpu_custom_call.1} parent=11 // pred_check_branch
          %201 = sbr.rel (%p199) target = $region16
        $region15: #{tpu_custom_call.1} parent=11 // pred_region
          %203 = vsyncadd [#allocation6], 0
          %s204 = sshll.u32 %s2, 4
          %s205 = int_to_ptr.hbm [resolvable:$true] %s204
          %s206 = sshll.u32 [#allocation7], 4
          %s207 = int_to_ptr.vmem [resolvable:$true] %s206
          %212 = dma.hbm_to_vmem [thread:$0]  %s205, 1024, %s207, [#allocation6], 64, 64, 4
        $region16: #{tpu_custom_call.1} parent=11 // pred_fallthru
          _
        // Predicated region
        $region17: #{tpu_custom_call.1} parent=11 // pred_check
          %p213 = pneg %p116
        $region18: #{tpu_custom_call.1} parent=11 // pred_check_branch
          %215 = sbr.rel (%p213) target = $region20
        $region19: #{tpu_custom_call.1} parent=11 // pred_region
          _
        $region20: #{tpu_custom_call.1} parent=11 // pred_fallthru
          _
        // Predicated region
        $region21: #{tpu_custom_call.1} parent=11 // pred_check
          %p216 = pneg %p137
        $region22: #{tpu_custom_call.1} parent=11 // pred_check_branch
          %218 = sbr.rel (%p216) target = $region24
        $region23: #{tpu_custom_call.1} parent=11 // pred_region
          %220 = vsyncadd [#allocation9], 0
          %s221 = sshll.u32 %s4, 4
          %s222 = int_to_ptr.hbm [resolvable:$true] %s221
          %s223 = sshll.u32 [#allocation8], 4
          %s224 = int_to_ptr.vmem [resolvable:$true] %s223
          %229 = dma.hbm_to_vmem [thread:$0]  %s222, 1024, %s224, [#allocation9], 64, 64, 4
        $region24: #{tpu_custom_call.1} parent=11 // pred_fallthru
          _
        // Predicated region
        $region25: #{tpu_custom_call.1} parent=11 // pred_check
          %p230 = pneg %p158
        $region26: #{tpu_custom_call.1} parent=11 // pred_check_branch
          %232 = sbr.rel (%p230) target = $region28
        $region27: #{tpu_custom_call.1} parent=11 // pred_region
          _
        $region28: #{tpu_custom_call.1} parent=11 // pred_fallthru
          _
      $region12: #{tpu_custom_call.1} parent=5 // pred_fallthru
        _
      %p233 = scmp.lt.s32.totalorder %s22, 4
      // Predicated region
      $region29: #{tpu_custom_call.1} parent=5 // pred_check
        %p234 = pneg %p233
      $region30: #{tpu_custom_call.1} parent=5 // pred_check_branch
        %236 = sbr.rel (%p234) target = $region32
      $region31: #{tpu_custom_call.1} parent=5 // pred_region
        // Predicated region
        $region33: #{tpu_custom_call.1} parent=31 // pred_check
          %p237 = pneg %p42
        $region34: #{tpu_custom_call.1} parent=31 // pred_check_branch
          %239 = sbr.rel (%p237) target = $region36
        $region35: #{tpu_custom_call.1} parent=31 // pred_region
          %s240 = sand.u32 %s32, 1
          %s241 = scalar_lea.sflag [#allocation3], %s240
          %s242 = sand.u32 %s32, 1
          %s243 = smul.addr %s242, 128
          %s244 = scalar_lea.vmem [#allocation2], %s243
          %s245 = smul.u32 8, %s22
          %247 = vsyncadd %s241, 0
          %s248 = smul.addr %s245, 2
          %s249 = smul.addr %s248, 8
          %s250 = scalar_lea.hbm %s0, %s249
          %s251 = sshll.u32 %s250, 4
          %s252 = int_to_ptr.hbm [resolvable:$true] %s251
          %s253 = sshll.u32 %s244, 4
          %s254 = int_to_ptr.vmem [resolvable:$true] %s253
          %259 = dma.hbm_to_vmem [thread:$0]  %s252, 2048, %s254, %s241, 128, 128, 8
        $region36: #{tpu_custom_call.1} parent=31 // pred_fallthru
          _
        // Predicated region
        $region37: #{tpu_custom_call.1} parent=31 // pred_check
          %p260 = pneg %p68
        $region38: #{tpu_custom_call.1} parent=31 // pred_check_branch
          %262 = sbr.rel (%p260) target = $region40
        $region39: #{tpu_custom_call.1} parent=31 // pred_region
          %s263 = sand.u32 %s22, 1
          %s264 = scalar_lea.sflag [#allocation6], %s263
          %s265 = sand.u32 %s58, 1
          %s266 = smul.addr %s265, 128
          %s267 = scalar_lea.vmem [#allocation5], %s266
          %s268 = smul.u32 8, %s22
          %270 = vsyncadd %s264, 0
          %s271 = smul.addr %s268, 2
          %s272 = smul.addr %s271, 8
          %s273 = scalar_lea.hbm %s1, %s272
          %s274 = sshll.u32 %s273, 4
          %s275 = int_to_ptr.hbm [resolvable:$true] %s274
          %s276 = sshll.u32 %s267, 4
          %s277 = int_to_ptr.vmem [resolvable:$true] %s276
          %282 = dma.hbm_to_vmem [thread:$0]  %s275, 2048, %s277, %s264, 128, 128, 8
        $region40: #{tpu_custom_call.1} parent=31 // pred_fallthru
          _
      $region32: #{tpu_custom_call.1} parent=5 // pred_fallthru
        _
      %p283 = scmp.le.s32.totalorder 1, %s22
      %p284 = scmp.lt.s32.totalorder %s22, 5
      %p285 = pnand %p283, %p284
      %p286 = pneg %p285
      // Predicated region
      $region41: #{tpu_custom_call.1} parent=5 // pred_check
        _
      $region42: #{tpu_custom_call.1} parent=5 // pred_check_branch
        %288 = sbr.rel (%p285) target = $region44
      $region43: #{tpu_custom_call.1} parent=5 // pred_region
        %s289 = ssub.s32 %s22, 1
        %s290 = sand.u32 %s35, 1
        %s291 = scalar_lea.sflag [#allocation3], %s290
        %s292 = sand.u32 %s35, 1
        %s293 = smul.addr %s292, 128
        %s294 = scalar_lea.vmem [#allocation2], %s293
        // Predicated region
        $region45: #{tpu_custom_call.1} parent=43 // pred_check
          %p295 = pneg %p48
        $region46: #{tpu_custom_call.1} parent=43 // pred_check_branch
          %297 = sbr.rel (%p295) target = $region48
        $region47: #{tpu_custom_call.1} parent=43 // pred_region
          %299 = dma.done %s291, 2048
        $region48: #{tpu_custom_call.1} parent=43 // pred_fallthru
          _
        %s300 = sand.u32 %s27, 1
        %s301 = scalar_lea.sflag [#allocation6], %s300
        %s302 = sand.u32 %s61, 1
        %s303 = smul.addr %s302, 128
        %s304 = scalar_lea.vmem [#allocation5], %s303
        // Predicated region
        $region49: #{tpu_custom_call.1} parent=43 // pred_check
          %p305 = pneg %p74
        $region50: #{tpu_custom_call.1} parent=43 // pred_check_branch
          %307 = sbr.rel (%p305) target = $region52
        $region51: #{tpu_custom_call.1} parent=43 // pred_region
          %309 = dma.done %s301, 2048
        $region52: #{tpu_custom_call.1} parent=43 // pred_fallthru
          _
        // Predicated region
        $region53: #{tpu_custom_call.1} parent=43 // pred_check
          %p310 = pneg %p95
        $region54: #{tpu_custom_call.1} parent=43 // pred_check_branch
          %312 = sbr.rel (%p310) target = $region56
        $region55: #{tpu_custom_call.1} parent=43 // pred_region
          %314 = dma.done [#allocation6], 1024
        $region56: #{tpu_custom_call.1} parent=43 // pred_fallthru
          _
        // Predicated region
        $region57: #{tpu_custom_call.1} parent=43 // pred_check
          %p315 = pneg %p137
        $region58: #{tpu_custom_call.1} parent=43 // pred_check_branch
          %317 = sbr.rel (%p315) target = $region60
        $region59: #{tpu_custom_call.1} parent=43 // pred_region
          %319 = dma.done [#allocation9], 1024
        $region60: #{tpu_custom_call.1} parent=43 // pred_fallthru
          _
        %s320 = sand.u32 %s35, 1
        %s321 = scalar_lea.sflag [#allocation3], %s320
        %s322 = sand.u32 %s35, 1
        %s323 = smul.addr %s322, 128
        %s324 = scalar_lea.vmem [#allocation2], %s323
        %p325 = pneg %p48
        %p326 = pneg %p45
        %s327 = sand.u32 %s27, 1
        %s328 = scalar_lea.sflag [#allocation6], %s327
        %s329 = sand.u32 %s61, 1
        %s330 = smul.addr %s329, 128
        %s331 = scalar_lea.vmem [#allocation5], %s330
        %p332 = pneg %p74
        %p333 = pneg %p71
        %p334 = pneg %p95
        %p335 = pneg %p92
        %p336 = pneg %p116
        %p337 = pneg %p113
        %p338 = pneg %p137
        %p339 = pneg %p134
        %p340 = pneg %p158
        %p341 = pneg %p155
        %p342 = pneg %p184
        %p343 = pneg %p181
        %s344 = sand.u32 %s171, 1
        %s345 = scalar_lea.sflag [#allocation4], %s344
        %s346 = sand.u32 %s171, 1
        %s347 = smul.addr %s346, 8
        %s348 = scalar_lea.vmem [#allocation10], %s347
        %s349 = smul.u32 8, %s27
        %s350 = smul.u32 8, %s27
        %v351 = vld [vmem:[%s294] sm:$0xff]
        %v352 = vld [vmem:[%s294 + $0x8] sm:$0xff]
        %v353 = vld [vmem:[%s294 + $0x10] sm:$0xff]
        %v354 = vld [vmem:[%s294 + $0x18] sm:$0xff]
        %v355 = vld [vmem:[%s294 + $0x20] sm:$0xff]
        %v356 = vld [vmem:[%s294 + $0x28] sm:$0xff]
        %v357 = vld [vmem:[%s294 + $0x30] sm:$0xff]
        %v358 = vld [vmem:[%s294 + $0x38] sm:$0xff]
        %v359 = vld [vmem:[%s294 + $0x40] sm:$0xff]
        %v360 = vld [vmem:[%s294 + $0x48] sm:$0xff]
        %v361 = vld [vmem:[%s294 + $0x50] sm:$0xff]
        %v362 = vld [vmem:[%s294 + $0x58] sm:$0xff]
        %v363 = vld [vmem:[%s294 + $0x60] sm:$0xff]
        %v364 = vld [vmem:[%s294 + $0x68] sm:$0xff]
        %v365 = vld [vmem:[%s294 + $0x70] sm:$0xff]
        %v366 = vld [vmem:[%s294 + $0x78] sm:$0xff]
        %v367 = vld [vmem:[%s304] sm:$0xff]
        %v368 = vld [vmem:[%s304 + $0x8] sm:$0xff]
        %v369 = vld [vmem:[%s304 + $0x10] sm:$0xff]
        %v370 = vld [vmem:[%s304 + $0x18] sm:$0xff]
        %v371 = vld [vmem:[%s304 + $0x20] sm:$0xff]
        %v372 = vld [vmem:[%s304 + $0x28] sm:$0xff]
        %v373 = vld [vmem:[%s304 + $0x30] sm:$0xff]
        %v374 = vld [vmem:[%s304 + $0x38] sm:$0xff]
        %v375 = vld [vmem:[%s304 + $0x40] sm:$0xff]
        %v376 = vld [vmem:[%s304 + $0x48] sm:$0xff]
        %v377 = vld [vmem:[%s304 + $0x50] sm:$0xff]
        %v378 = vld [vmem:[%s304 + $0x58] sm:$0xff]
        %v379 = vld [vmem:[%s304 + $0x60] sm:$0xff]
        %v380 = vld [vmem:[%s304 + $0x68] sm:$0xff]
        %v381 = vld [vmem:[%s304 + $0x70] sm:$0xff]
        %v382 = vld [vmem:[%s304 + $0x78] sm:$0xff]
        %v383 = vmul.f32 %v351, %v367
        %v384 = vmul.f32 %v352, %v368
        %v385 = vmul.f32 %v353, %v369
        %v386 = vmul.f32 %v354, %v370
        %v387 = vmul.f32 %v355, %v371
        %v388 = vmul.f32 %v356, %v372
        %v389 = vmul.f32 %v357, %v373
        %v390 = vmul.f32 %v358, %v374
        %v391 = vmul.f32 %v359, %v375
        %v392 = vmul.f32 %v360, %v376
        %v393 = vmul.f32 %v361, %v377
        %v394 = vmul.f32 %v362, %v378
        %v395 = vmul.f32 %v363, %v379
        %v396 = vmul.f32 %v364, %v380
        %v397 = vmul.f32 %v365, %v381
        %v398 = vmul.f32 %v366, %v382
        %v399 = vpack.c.bf16 %v384, %v383
        %v400 = vpack.c.bf16 %v386, %v385
        %v401 = vpack.c.bf16 %v388, %v387
        %v402 = vpack.c.bf16 %v390, %v389
        %v403 = vpack.c.bf16 %v392, %v391
        %v404 = vpack.c.bf16 %v394, %v393
        %v405 = vpack.c.bf16 %v396, %v395
        %v406 = vpack.c.bf16 %v398, %v397
        %v407 = vld [vmem:[#allocation7] sm:$0xf]
        %v408 = vld [vmem:[#allocation7 + $0x4] sm:$0xf]
        %v409 = vld [vmem:[#allocation7 + $0x8] sm:$0xf]
        %v410 = vld [vmem:[#allocation7 + $0xc] sm:$0xf]
        %v411 = vld [vmem:[#allocation7 + $0x10] sm:$0xf]
        %v412 = vld [vmem:[#allocation7 + $0x14] sm:$0xf]
        %v413 = vld [vmem:[#allocation7 + $0x18] sm:$0xf]
        %v414 = vld [vmem:[#allocation7 + $0x1c] sm:$0xf]
        %v415 = vld [vmem:[#allocation7 + $0x20] sm:$0xf]
        %v416 = vld [vmem:[#allocation7 + $0x24] sm:$0xf]
        %v417 = vld [vmem:[#allocation7 + $0x28] sm:$0xf]
        %v418 = vld [vmem:[#allocation7 + $0x2c] sm:$0xf]
        %v419 = vld [vmem:[#allocation7 + $0x30] sm:$0xf]
        %v420 = vld [vmem:[#allocation7 + $0x34] sm:$0xf]
        %v421 = vld [vmem:[#allocation7 + $0x38] sm:$0xf]
        %v422 = vld [vmem:[#allocation7 + $0x3c] sm:$0xf]
        %v423 = vld [vmem:[%s3] sm:$0x1]
        %v425 = vperm.slane %v423, 0
        %v443 = vunpack.c.l.b16 %v407
        %v444 = vunpack.c.l.b16 %v408
        %v445 = vunpack.c.l.b16 %v409
        %v446 = vunpack.c.l.b16 %v410
        %v447 = vunpack.c.l.b16 %v411
        %v448 = vunpack.c.l.b16 %v412
        %v449 = vunpack.c.l.b16 %v413
        %v450 = vunpack.c.l.b16 %v414
        %v451 = vunpack.c.l.b16 %v415
        %v452 = vunpack.c.l.b16 %v416
        %v453 = vunpack.c.l.b16 %v417
        %v454 = vunpack.c.l.b16 %v418
        %v455 = vunpack.c.l.b16 %v419
        %v456 = vunpack.c.l.b16 %v420
        %v457 = vunpack.c.l.b16 %v421
        %v458 = vunpack.c.l.b16 %v422
        %v459 = vpack.c.b16 %v444, %v443
        %v460 = vpack.c.b16 %v446, %v445
        %v461 = vpack.c.b16 %v448, %v447
        %v462 = vpack.c.b16 %v450, %v449
        %v463 = vpack.c.b16 %v452, %v451
        %v464 = vpack.c.b16 %v454, %v453
        %v465 = vpack.c.b16 %v456, %v455
        %v466 = vpack.c.b16 %v458, %v457
        %475 = vmatpush.bf16.msra.mxu0 %v466
        %476 = vmatpush.bf16.msra.mxu0 %v465
        %477 = vmatpush.bf16.msra.mxu0 %v464
        %478 = vmatpush.bf16.msra.mxu0 %v463
        %479 = vmatpush.bf16.msra.mxu0 %v462
        %480 = vmatpush.bf16.msra.mxu0 %v461
        %481 = vmatpush.bf16.msra.mxu0 %v460
        %482 = vmatpush.bf16.msra.mxu0 %v459
        %483 = vmatmul.bf16.gmra.mxu0 %v399
        %v484 = vpop.f32.mrf.mxu0
        %v485 = vadd.f32 %v425, %v484
        %v486 = vpop.f32.mrf.mxu0
        %v487 = vadd.f32 %v425, %v486
        %488 = vmatmul.bf16.gmra.mxu0 %v400
        %v489 = vpop.f32.mrf.mxu0
        %v490 = vadd.f32 %v425, %v489
        %v491 = vpop.f32.mrf.mxu0
        %v492 = vadd.f32 %v425, %v491
        %493 = vmatmul.bf16.gmra.mxu0 %v401
        %v494 = vpop.f32.mrf.mxu0
        %v495 = vadd.f32 %v425, %v494
        %v496 = vpop.f32.mrf.mxu0
        %v497 = vadd.f32 %v425, %v496
        %498 = vmatmul.bf16.gmra.mxu0 %v402
        %v499 = vpop.f32.mrf.mxu0
        %v500 = vadd.f32 %v425, %v499
        %v501 = vpop.f32.mrf.mxu0
        %v502 = vadd.f32 %v425, %v501
        %503 = vmatmul.bf16.gmra.mxu0 %v403
        %v504 = vpop.f32.mrf.mxu0
        %v505 = vadd.f32 %v425, %v504
        %v506 = vpop.f32.mrf.mxu0
        %v507 = vadd.f32 %v425, %v506
        %508 = vmatmul.bf16.gmra.mxu0 %v404
        %v509 = vpop.f32.mrf.mxu0
        %v510 = vadd.f32 %v425, %v509
        %v511 = vpop.f32.mrf.mxu0
        %v512 = vadd.f32 %v425, %v511
        %513 = vmatmul.bf16.gmra.mxu0 %v405
        %v514 = vpop.f32.mrf.mxu0
        %v515 = vadd.f32 %v425, %v514
        %v516 = vpop.f32.mrf.mxu0
        %v517 = vadd.f32 %v425, %v516
        %518 = vmatmul.bf16.gmra.mxu0 %v406
        %v519 = vpop.f32.mrf.mxu0
        %v520 = vadd.f32 %v425, %v519
        %v521 = vpop.f32.mrf.mxu0
        %v522 = vadd.f32 %v425, %v521
        %523 = vdwg.mxu0
        %v524 = vmax.f32 %v485, 0.0
        %v525 = vmax.f32 %v487, 0.0
        %v526 = vmax.f32 %v490, 0.0
        %v527 = vmax.f32 %v492, 0.0
        %v528 = vmax.f32 %v495, 0.0
        %v529 = vmax.f32 %v497, 0.0
        %v530 = vmax.f32 %v500, 0.0
        %v531 = vmax.f32 %v502, 0.0
        %v532 = vmax.f32 %v505, 0.0
        %v533 = vmax.f32 %v507, 0.0
        %v534 = vmax.f32 %v510, 0.0
        %v535 = vmax.f32 %v512, 0.0
        %v536 = vmax.f32 %v515, 0.0
        %v537 = vmax.f32 %v517, 0.0
        %v538 = vmax.f32 %v520, 0.0
        %v539 = vmax.f32 %v522, 0.0
        %v540 = vpack.c.bf16 %v525, %v524
        %v541 = vpack.c.bf16 %v527, %v526
        %v542 = vpack.c.bf16 %v529, %v528
        %v543 = vpack.c.bf16 %v531, %v530
        %v544 = vpack.c.bf16 %v533, %v532
        %v545 = vpack.c.bf16 %v535, %v534
        %v546 = vpack.c.bf16 %v537, %v536
        %v547 = vpack.c.bf16 %v539, %v538
        %v548 = vld [vmem:[#allocation8] sm:$0xf]
        %v549 = vld [vmem:[#allocation8 + $0x4] sm:$0xf]
        %v550 = vld [vmem:[#allocation8 + $0x8] sm:$0xf]
        %v551 = vld [vmem:[#allocation8 + $0xc] sm:$0xf]
        %v552 = vld [vmem:[#allocation8 + $0x10] sm:$0xf]
        %v553 = vld [vmem:[#allocation8 + $0x14] sm:$0xf]
        %v554 = vld [vmem:[#allocation8 + $0x18] sm:$0xf]
        %v555 = vld [vmem:[#allocation8 + $0x1c] sm:$0xf]
        %v556 = vld [vmem:[#allocation8 + $0x20] sm:$0xf]
        %v557 = vld [vmem:[#allocation8 + $0x24] sm:$0xf]
        %v558 = vld [vmem:[#allocation8 + $0x28] sm:$0xf]
        %v559 = vld [vmem:[#allocation8 + $0x2c] sm:$0xf]
        %v560 = vld [vmem:[#allocation8 + $0x30] sm:$0xf]
        %v561 = vld [vmem:[#allocation8 + $0x34] sm:$0xf]
        %v562 = vld [vmem:[#allocation8 + $0x38] sm:$0xf]
        %v563 = vld [vmem:[#allocation8 + $0x3c] sm:$0xf]
        %v580 = vunpack.c.l.b16 %v548
        %v581 = vunpack.c.l.b16 %v549
        %v582 = vunpack.c.l.b16 %v550
        %v583 = vunpack.c.l.b16 %v551
        %v584 = vunpack.c.l.b16 %v552
        %v585 = vunpack.c.l.b16 %v553
        %v586 = vunpack.c.l.b16 %v554
        %v587 = vunpack.c.l.b16 %v555
        %v588 = vunpack.c.l.b16 %v556
        %v589 = vunpack.c.l.b16 %v557
        %v590 = vunpack.c.l.b16 %v558
        %v591 = vunpack.c.l.b16 %v559
        %v592 = vunpack.c.l.b16 %v560
        %v593 = vunpack.c.l.b16 %v561
        %v594 = vunpack.c.l.b16 %v562
        %v595 = vunpack.c.l.b16 %v563
        %v596 = vpack.c.b16 %v581, %v580
        %v597 = vpack.c.b16 %v583, %v582
        %v598 = vpack.c.b16 %v585, %v584
        %v599 = vpack.c.b16 %v587, %v586
        %v600 = vpack.c.b16 %v589, %v588
        %v601 = vpack.c.b16 %v591, %v590
        %v602 = vpack.c.b16 %v593, %v592
        %v603 = vpack.c.b16 %v595, %v594
        %612 = vmatpush.bf16.msra.mxu0 %v603
        %613 = vmatpush.bf16.msra.mxu0 %v602
        %614 = vmatpush.bf16.msra.mxu0 %v601
        %615 = vmatpush.bf16.msra.mxu0 %v600
        %616 = vmatpush.bf16.msra.mxu0 %v599
        %617 = vmatpush.bf16.msra.mxu0 %v598
        %618 = vmatpush.bf16.msra.mxu0 %v597
        %619 = vmatpush.bf16.msra.mxu0 %v596
        %620 = vmatmul.bf16.gmra.mxu0 %v540
        %v621 = vpop.f32.mrf.mxu0
        %v622 = vadd.f32 0.0, %v621
        %v623 = vpop.f32.mrf.mxu0
        %v624 = vadd.f32 0.0, %v623
        %625 = vmatmul.bf16.gmra.mxu0 %v541
        %v626 = vpop.f32.mrf.mxu0
        %v627 = vadd.f32 0.0, %v626
        %v628 = vpop.f32.mrf.mxu0
        %v629 = vadd.f32 0.0, %v628
        %630 = vmatmul.bf16.gmra.mxu0 %v542
        %v631 = vpop.f32.mrf.mxu0
        %v632 = vadd.f32 0.0, %v631
        %v633 = vpop.f32.mrf.mxu0
        %v634 = vadd.f32 0.0, %v633
        %635 = vmatmul.bf16.gmra.mxu0 %v543
        %v636 = vpop.f32.mrf.mxu0
        %v637 = vadd.f32 0.0, %v636
        %v638 = vpop.f32.mrf.mxu0
        %v639 = vadd.f32 0.0, %v638
        %640 = vmatmul.bf16.gmra.mxu0 %v544
        %v641 = vpop.f32.mrf.mxu0
        %v642 = vadd.f32 0.0, %v641
        %v643 = vpop.f32.mrf.mxu0
        %v644 = vadd.f32 0.0, %v643
        %645 = vmatmul.bf16.gmra.mxu0 %v545
        %v646 = vpop.f32.mrf.mxu0
        %v647 = vadd.f32 0.0, %v646
        %v648 = vpop.f32.mrf.mxu0
        %v649 = vadd.f32 0.0, %v648
        %650 = vmatmul.bf16.gmra.mxu0 %v546
        %v651 = vpop.f32.mrf.mxu0
        %v652 = vadd.f32 0.0, %v651
        %v653 = vpop.f32.mrf.mxu0
        %v654 = vadd.f32 0.0, %v653
        %655 = vmatmul.bf16.gmra.mxu0 %v547
        %v656 = vpop.f32.mrf.mxu0
        %v657 = vadd.f32 0.0, %v656
        %v658 = vpop.f32.mrf.mxu0
        %v659 = vadd.f32 0.0, %v658
        %660 = vdwg.mxu0
        %v661 = vmax.f32 %v622, %v624
        %v662 = vrot.slane %v661, 4
        %v663 = vmax.f32 %v661, %v662
        %v664 = vrot.slane %v663, 2
        %v665 = vmax.f32 %v663, %v664
        %v666 = vrot.slane %v665, 1
        %v667 = vmax.f32 %v665, %v666
        %v668 = vmax.f32 %v627, %v629
        %v669 = vrot.slane %v668, 4
        %v670 = vmax.f32 %v668, %v669
        %v671 = vrot.slane %v670, 2
        %v672 = vmax.f32 %v670, %v671
        %v673 = vrot.slane %v672, 1
        %v674 = vmax.f32 %v672, %v673
        %v675 = vmax.f32 %v632, %v634
        %v676 = vrot.slane %v675, 4
        %v677 = vmax.f32 %v675, %v676
        %v678 = vrot.slane %v677, 2
        %v679 = vmax.f32 %v677, %v678
        %v680 = vrot.slane %v679, 1
        %v681 = vmax.f32 %v679, %v680
        %v682 = vmax.f32 %v637, %v639
        %v683 = vrot.slane %v682, 4
        %v684 = vmax.f32 %v682, %v683
        %v685 = vrot.slane %v684, 2
        %v686 = vmax.f32 %v684, %v685
        %v687 = vrot.slane %v686, 1
        %v688 = vmax.f32 %v686, %v687
        %v689 = vmax.f32 %v642, %v644
        %v690 = vrot.slane %v689, 4
        %v691 = vmax.f32 %v689, %v690
        %v692 = vrot.slane %v691, 2
        %v693 = vmax.f32 %v691, %v692
        %v694 = vrot.slane %v693, 1
        %v695 = vmax.f32 %v693, %v694
        %v696 = vmax.f32 %v647, %v649
        %v697 = vrot.slane %v696, 4
        %v698 = vmax.f32 %v696, %v697
        %v699 = vrot.slane %v698, 2
        %v700 = vmax.f32 %v698, %v699
        %v701 = vrot.slane %v700, 1
        %v702 = vmax.f32 %v700, %v701
        %v703 = vmax.f32 %v652, %v654
        %v704 = vrot.slane %v703, 4
        %v705 = vmax.f32 %v703, %v704
        %v706 = vrot.slane %v705, 2
        %v707 = vmax.f32 %v705, %v706
        %v708 = vrot.slane %v707, 1
        %v709 = vmax.f32 %v707, %v708
        %v710 = vmax.f32 %v657, %v659
        %v711 = vrot.slane %v710, 4
        %v712 = vmax.f32 %v710, %v711
        %v713 = vrot.slane %v712, 2
        %v714 = vmax.f32 %v712, %v713
        %v715 = vrot.slane %v714, 1
        %v716 = vmax.f32 %v714, %v715
        %v717 = vld [vmem:[%s5] sm:$0x1]
        %v719 = vperm.slane %v717, 0
        %v721 = vadd.f32 %v667, %v719
        %v722 = vadd.f32 %v674, %v719
        %v723 = vadd.f32 %v681, %v719
        %v724 = vadd.f32 %v688, %v719
        %v725 = vadd.f32 %v695, %v719
        %v726 = vadd.f32 %v702, %v719
        %v727 = vadd.f32 %v709, %v719
        %v728 = vadd.f32 %v716, %v719
        %v737 = vrot.slane %v722, 7
        %vm738 = vcmask 1041409
        %v739 = vsel %vm738, %v737, %v721
        %v740 = vrot.slane %v723, 6
        %vm741 = vcmask 1042434
        %v742 = vsel %vm741, %v740, %v739
        %v743 = vrot.slane %v724, 5
        %vm744 = vcmask 1043459
        %v745 = vsel %vm744, %v743, %v742
        %v746 = vrot.slane %v725, 4
        %vm747 = vcmask 1044484
        %v748 = vsel %vm747, %v746, %v745
        %v749 = vrot.slane %v726, 3
        %vm750 = vcmask 1045509
        %v751 = vsel %vm750, %v749, %v748
        %v752 = vrot.slane %v727, 2
        %vm753 = vcmask 1046534
        %v754 = vsel %vm753, %v752, %v751
        %v755 = vrot.slane %v728, 1
        %vm756 = vcmask 1047559
        %v757 = vsel %vm756, %v755, %v754
        %759 = vst [vmem:[%s348] sm:$0xff] %v757
        %s760 = sand.u32 %s171, 1
        %s761 = scalar_lea.sflag [#allocation4], %s760
        %s762 = sand.u32 %s171, 1
        %s763 = smul.addr %s762, 8
        %s764 = scalar_lea.vmem [#allocation10], %s763
        // Predicated region
        $region61: #{tpu_custom_call.1} parent=43 // pred_check
          %p765 = pneg %p181
        $region62: #{tpu_custom_call.1} parent=43 // pred_check_branch
          %767 = sbr.rel (%p765) target = $region64
        $region63: #{tpu_custom_call.1} parent=43 // pred_region
          %769 = vsyncadd %s761, 0
          %s770 = smul.addr %s27, 8
          %s771 = scalar_lea.hbm %s6, %s770
          %s773 = sshll.u32 %s764, 4
          %s774 = int_to_ptr.vmem [resolvable:$true] %s773
          %s775 = sshll.u32 %s771, 4
          %s776 = int_to_ptr.hbm [resolvable:$true] %s775
          %778 = dma.vmem_to_hbm [thread:$0]  %s774, 128, %s776, %s761
        $region64: #{tpu_custom_call.1} parent=43 // pred_fallthru
          _
      $region44: #{tpu_custom_call.1} parent=5 // pred_fallthru
        _
      %p779 = scmp.le.s32.totalorder 2, %s22
      // Predicated region
      $region65: #{tpu_custom_call.1} parent=5 // pred_check
        %p780 = pneg %p779
      $region66: #{tpu_custom_call.1} parent=5 // pred_check_branch
        %782 = sbr.rel (%p780) target = $region68
      $region67: #{tpu_custom_call.1} parent=5 // pred_region
        %s783 = ssub.s32 %s22, 2
        // Predicated region
        $region69: #{tpu_custom_call.1} parent=67 // pred_check
          %p784 = pneg %p187
        $region70: #{tpu_custom_call.1} parent=67 // pred_check_branch
          %786 = sbr.rel (%p784) target = $region72
        $region71: #{tpu_custom_call.1} parent=67 // pred_region
          %s787 = sand.u32 %s172, 1
          %s788 = scalar_lea.sflag [#allocation4], %s787
          %s789 = sand.u32 %s172, 1
          %s790 = smul.addr %s789, 8
          %s791 = scalar_lea.vmem [#allocation10], %s790
          %793 = dma.done %s788, 128
        $region72: #{tpu_custom_call.1} parent=67 // pred_fallthru
          _
      $region68: #{tpu_custom_call.1} parent=5 // pred_fallthru
        _
    $region6: #{tpu_custom_call.1} parent=1 // loop_footer
      %s26 = sadd.s32 1, %s22
    $region7: #{tpu_custom_call.1} parent=1 // loop_footer_branch
      %21 = sbr.rel target = $region3
    $region8: #{tpu_custom_call.1} parent=1 // loop_exit
      _
    %794 = vsyncpa [#allocation3], 1
    %s795 = scalar_lea.sflag [#allocation3], 1
    %796 = vsyncpa %s795, 1
    %797 = vsyncpa [#allocation6], 1
    %s798 = scalar_lea.sflag [#allocation6], 1
    %799 = vsyncpa %s798, 1
    %800 = vsyncpa [#allocation9], 1
    %801 = vsyncpa [#allocation4], 1
    %s802 = scalar_lea.sflag [#allocation4], 1
    %803 = vsyncpa %s802, 1

</llo_original>
